<compile_context>
chip_gen: v7x
topology: tpu7x:2x2x1
jax: 0.10.0
libtpu: 0.0.40
codegen_flags: <defaults>
</compile_context>

<pallas_src>
import functools

import numpy as np
import jax
import jax.numpy as jnp
from jax.experimental import pallas as pl
from jax.experimental.pallas import tpu as pltpu


def _round_up(x, m):
    return ((x + m - 1) // m) * m


@functools.lru_cache(maxsize=1)
def _vmem_config():
    """(vmem_limit_bytes, working_set_budget) derived from the local TPU generation."""
    try:
        vmem = int(pltpu.get_tpu_info().vmem_capacity_bytes)
    except Exception:  # no TPU info available -> conservative (v7x-sized) default
        vmem = 64 * 1024 * 1024
    limit = max(32 * 1024 * 1024, min(int(vmem * 0.80), vmem - 8 * 1024 * 1024))
    working = limit // 2  # total bytes for the double-buffered x/out blocks of a step
    return limit, working


def _choose_tile_rows(n_rows, bytes_per_row, row_align, working_set_bytes):
    """Largest double-buffered row tile that fits the VMEM budget.

    A soft cap keeps >= ~8 grid steps (v7x shares the 'parallel' grid across its 2
    TensorCores) but never shrinks a step below ~2 MiB of data moved, so the ~0.35us
    per-step pipeline overhead stays negligible."""
    budget_rows = max(row_align, working_set_bytes // (2 * bytes_per_row))
    if budget_rows >= n_rows:
        return n_rows                              # one block covering the whole array
    balance_rows = pl.cdiv(n_rows, 8)
    min_step_rows = max(row_align, (2 * 1024 * 1024) // bytes_per_row)
    tile_rows = min(budget_rows, max(balance_rows, min_step_rows))
    return max(row_align, (tile_rows // row_align) * row_align)


# ----------------------------- kernels ------------------------------------ #

def _make_mix_kernel(k_count):
    # w_ref: (K,) scaled weights in SMEM, b_ref: (1,) scalar bias in SMEM,
    # refs = (x_0 .. x_{K-1}, o_ref) with (tile_rows, D) VMEM blocks.
    # Partial last block: OOB input rows are garbage but the matching output rows are
    # clipped on writeback, so no masking is needed here.
    def kernel(w_ref, b_ref, *refs):
        o_ref = refs[k_count]
        acc = w_ref[0] * refs[0][...].astype(jnp.float32) + b_ref[0]
        for k in range(1, k_count):                # K is small & static -> unrolled
            acc = acc + w_ref[k] * refs[k][...].astype(jnp.float32)
        o_ref[...] = acc.astype(o_ref.dtype)
    return kernel


def _make_stats_kernel(k_count):
    # m_ref: (tile_rows, 1) 0/1 mask (zero-padded past N),
    # refs = (x_0 .. x_{K-1}, s_ref, q_ref); s/q are (1, K, D) per-tile partials.
    def kernel(m_ref, *refs):
        s_ref = refs[k_count]
        q_ref = refs[k_count + 1]
        m = m_ref[...].astype(jnp.float32)          # (T, 1); pad & masked rows are 0
        keep = m != 0.0
        t = refs[0].shape[0]
        ones_row = jnp.ones((1, t), jnp.float32)
        s_parts, q_parts = [], []
        for k in range(k_count):
            x = refs[k][...].astype(jnp.float32)
            # jnp.where (select, not multiply) so undefined OOB rows of the partial
            # last block are discarded even if they contain NaN/Inf garbage.
            xm = jnp.where(keep, x * m, 0.0)        # == x * mask for a 0/1 mask
            # cross-sublane reductions on the otherwise idle MXU
            s_parts.append(jnp.dot(ones_row, xm, preferred_element_type=jnp.float32))
            q_parts.append(jnp.dot(ones_row, xm * xm, preferred_element_type=jnp.float32))
        s_ref[0] = jnp.concatenate(s_parts, axis=0)  # one dense (K, D) store
        q_ref[0] = jnp.concatenate(q_parts, axis=0)
    return kernel


# ----------------------------- wrapper ------------------------------------ #

def scalar_mix(tensors, scalar_parameters, gamma, mask=None, do_layer_norm=False,
               tile_rows=None):
    """Pallas implementation of ScalarMix.forward.

    `tile_rows` is a testing knob to force a specific row tile (normally auto-picked
    from the per-generation VMEM budget)."""
    K = len(tensors)
    lead_shape = tensors[0].shape[:-1]
    D = tensors[0].shape[-1]
    N = int(np.prod(lead_shape))
    dtype = tensors[0].dtype
    for t in tensors[1:]:
        if t.shape != tensors[0].shape or t.dtype != dtype:
            raise ValueError("all mixed tensors must share the same shape and dtype")
    itemsize = jnp.dtype(dtype).itemsize
    row_align = max(8, 32 // itemsize)            # sublane packing: 8 (f32) / 16 (bf16)

    vmem_limit, working_set = _vmem_config()
    bytes_per_row = (K + 1) * D * itemsize        # K input streams + 1 output stream
    if tile_rows is None:
        tile_rows = _choose_tile_rows(N, bytes_per_row, row_align, working_set)
    else:
        tile_rows = min(int(tile_rows), N)
        if tile_rows < N:
            tile_rows = max(row_align, (tile_rows // row_align) * row_align)
    n_tiles = pl.cdiv(N, tile_rows)

    xs = [t.reshape(N, D) for t in tensors]       # free reshape, no HBM copy

    # softmax over the K scalar parameters + gamma (tiny, stays in plain JAX glue)
    w = jax.nn.softmax(jnp.asarray(scalar_parameters, jnp.float32).reshape(K))
    g = jnp.asarray(gamma, jnp.float32).reshape(())

    smem_spec = pl.BlockSpec(memory_space=pltpu.MemorySpace.SMEM)
    x_spec = pl.BlockSpec((tile_rows, D), lambda i: (i, 0))
    o_spec = pl.BlockSpec((tile_rows, D), lambda i: (i, 0))
    cparams = pltpu.CompilerParams(
        dimension_semantics=("parallel",),
        vmem_limit_bytes=vmem_limit)

    def run_mix(w_eff, b_eff):
        out = pl.pallas_call(
            _make_mix_kernel(K),
            out_shape=jax.ShapeDtypeStruct((N, D), dtype),
            grid=(n_tiles,),
            in_specs=[smem_spec, smem_spec] + [x_spec] * K,
            out_specs=o_spec,
            compiler_params=cparams,
        )(w_eff, b_eff, *xs)
        return out.reshape(*lead_shape, D)

    if not do_layer_norm:
        return run_mix(g * w, jnp.zeros((1,), jnp.float32))

    assert mask is not None, "mask required when do_layer_norm=True"
    # Pad ONLY the tiny (N, 1) mask; zero rows past N drop out of the statistics.
    mask_f = mask.astype(jnp.float32).reshape(N, 1)
    n_pad = n_tiles * tile_rows
    mask_in = jnp.pad(mask_f, ((0, n_pad - N), (0, 0))) if n_pad != N else mask_f

    m_spec = pl.BlockSpec((tile_rows, 1), lambda i: (i, 0))
    stat_spec = pl.BlockSpec((1, K, D), lambda i: (i, 0, 0))  # one partial block/tile

    sums, sqsums = pl.pallas_call(
        _make_stats_kernel(K),
        out_shape=(jax.ShapeDtypeStruct((n_tiles, K, D), jnp.float32),
                   jax.ShapeDtypeStruct((n_tiles, K, D), jnp.float32)),
        grid=(n_tiles,),
        in_specs=[m_spec] + [x_spec] * K,
        out_specs=(stat_spec, stat_spec),
        compiler_params=cparams,
    )(mask_in, *xs)

    # Tiny (K,)-sized reductions in JAX glue.
    num_not_masked = jnp.sum(mask_f) * D          # == torch.sum(mask_float) * input_dim
    total = jnp.sum(sums, axis=(0, 2))            # (K,)
    total_sq = jnp.sum(sqsums, axis=(0, 2))       # (K,)
    mean = total / num_not_masked
    # For a 0/1 mask: sum(((x*m - mean)*m)^2) == sum((x*m)^2) - n*mean^2 exactly.
    # (E[x^2]-mean^2 in f32 can lose precision when |mean| >> std; acceptable here.)
    var = jnp.maximum(total_sq / num_not_masked - mean * mean, 0.0)
    istd = 1.0 / jnp.sqrt(var + 1e-12)
    # TODO(synk): num_not_masked == 0 yields NaN/Inf, matching the PyTorch reference.

    # Fold gamma / mean / istd into per-layer scales + one scalar bias and reuse the
    # streaming mix kernel:  out = sum_k (g*w_k*istd_k)*x_k - g*sum_k w_k*mean_k*istd_k
    w_eff = g * w * istd
    b_eff = (-(g * jnp.sum(w * mean * istd))).reshape(1)
    return run_mix(w_eff, b_eff)


# ----------------------------- reference ---------------------------------- #

def scalar_mix_ref(tensors, scalar_parameters, gamma, mask=None, do_layer_norm=False):
    w = jax.nn.softmax(jnp.asarray(scalar_parameters, jnp.float32))
    gamma = jnp.asarray(gamma, jnp.float32)
    if not do_layer_norm:
        out = sum(w[k] * tensors[k].astype(jnp.float32) for k in range(len(tensors)))
        return gamma * out
    mask_f = mask.astype(jnp.float32)
    bm = mask_f[..., None]
    D = tensors[0].shape[-1]
    n = jnp.sum(mask_f) * D
    out = 0.0
    for k, t in enumerate(tensors):
        t = t.astype(jnp.float32)
        tm = t * bm
        mean = jnp.sum(tm) / n
        var = jnp.sum(((tm - mean) * bm) ** 2) / n
        out = out + w[k] * ((t - mean) / jnp.sqrt(var + 1e-12))
    return gamma * out


# ------------------------------- main -------------------------------------- #

if __name__ == "__main__":
    mixture_size = 3
    B, T, D = 2, 8, 128

    key = jax.random.PRNGKey(0)
    keys = jax.random.split(key, mixture_size + 1)
    tensors = [jax.random.normal(keys[k], (B, T, D), dtype=jnp.float32)
               for k in range(mixture_size)]
    mask = (jax.random.uniform(keys[-1], (B, T)) > 0.25).astype(jnp.float32)

    # deterministic parameter init (ScalarMix.__init__: K scalars + gamma)
    scalar_parameters = jnp.array([0.5, -0.3, 0.1], dtype=jnp.float32)
    gamma = 1.0

    # do_layer_norm=False path (f32)
    out_plain = scalar_mix(tensors, scalar_parameters, gamma, do_layer_norm=False)
    out_plain = jax.block_until_ready(out_plain)
    ref_plain = scalar_mix_ref(tensors, scalar_parameters, gamma, do_layer_norm=False)
    np.testing.assert_allclose(np.asarray(out_plain), np.asarray(ref_plain),
                               rtol=1e-4, atol=1e-4)

    # do_layer_norm=True path (masked, global layer norm per tensor)
    out_ln = scalar_mix(tensors, scalar_parameters, gamma, mask=mask,
                        do_layer_norm=True)
    out_ln = jax.block_until_ready(out_ln)
    ref_ln = scalar_mix_ref(tensors, scalar_parameters, gamma, mask=mask,
                            do_layer_norm=True)
    np.testing.assert_allclose(np.asarray(out_ln), np.asarray(ref_ln),
                               rtol=1e-4, atol=1e-4)

    # native-dtype path: bf16 in HBM, f32 accumulation in-register, bf16 output
    tensors_bf16 = [t.astype(jnp.bfloat16) for t in tensors]
    out_bf16 = scalar_mix(tensors_bf16, scalar_parameters, gamma, do_layer_norm=False)
    out_bf16 = jax.block_until_ready(out_bf16)
    ref_bf16 = scalar_mix_ref(tensors_bf16, scalar_parameters, gamma, do_layer_norm=False)
    np.testing.assert_allclose(np.asarray(out_bf16, dtype=np.float32),
                               np.asarray(ref_bf16), rtol=3e-2, atol=3e-2)

    # forced small tile + ragged N: exercises the unpadded partial last block
    # (clipped OOB writes in the mix pass, zero-padded mask in the stats pass)
    B2, T2 = 2, 13                                  # N = 26, not a multiple of 8
    keys2 = jax.random.split(jax.random.PRNGKey(1), mixture_size + 1)
    tensors2 = [jax.random.normal(keys2[k], (B2, T2, D), dtype=jnp.float32)
                for k in range(mixture_size)]
    mask2 = (jax.random.uniform(keys2[-1], (B2, T2)) > 0.25).astype(jnp.float32)
    out_p2 = jax.block_until_ready(
        scalar_mix(tensors2, scalar_parameters, gamma, do_layer_norm=False, tile_rows=8))
    np.testing.assert_allclose(
        np.asarray(out_p2),
        np.asarray(scalar_mix_ref(tensors2, scalar_parameters, gamma)),
        rtol=1e-4, atol=1e-4)
    out_l2 = jax.block_until_ready(
        scalar_mix(tensors2, scalar_parameters, gamma, mask=mask2,
                   do_layer_norm=True, tile_rows=8))
    np.testing.assert_allclose(
        np.asarray(out_l2),
        np.asarray(scalar_mix_ref(tensors2, scalar_parameters, gamma,
                                  mask=mask2, do_layer_norm=True)),
        rtol=1e-4, atol=1e-4)

    print("KERNEL_OK")
</pallas_src>

<mosaic_0001>
module attributes {stable_mosaic.version = 11 : i64} {
  func.func @kernel(%arg0: i32, %arg1: memref<3xf32, #tpu.memory_space<smem>>, %arg2: memref<1xf32, #tpu.memory_space<smem>>, %arg3: memref<16x128xf32, #tpu.memory_space<vmem>>, %arg4: memref<16x128xf32, #tpu.memory_space<vmem>>, %arg5: memref<16x128xf32, #tpu.memory_space<vmem>>, %arg6: memref<16x128xf32, #tpu.memory_space<vmem>>) attributes {dimension_semantics = [#tpu.dimension_semantics<parallel>], iteration_bounds = array<i64: 1>, scalar_prefetch = 0 : i64, scratch_operands = 0 : i64, tpu.core_type = #tpu.core_type<tc>, window_params = [{transform_indices = @transform_0, window_bounds = array<i64: 3>}, {transform_indices = @transform_1, window_bounds = array<i64: 1>}, {transform_indices = @transform_2, window_bounds = array<i64: 16, 128>}, {transform_indices = @transform_3, window_bounds = array<i64: 16, 128>}, {transform_indices = @transform_4, window_bounds = array<i64: 16, 128>}, {transform_indices = @transform_5, window_bounds = array<i64: 16, 128>}]} {
    %c0 = arith.constant 0 : index
    %0 = memref.load %arg1[%c0] : memref<3xf32, #tpu.memory_space<smem>>
    %c0_0 = arith.constant 0 : index
    %c0_1 = arith.constant 0 : index
    %1 = vector.load %arg3[%c0_0, %c0_1] : memref<16x128xf32, #tpu.memory_space<vmem>>, vector<16x128xf32>
    %2 = vector.broadcast %0 : f32 to vector<16x128xf32>
    %3 = arith.mulf %2, %1 : vector<16x128xf32>
    %c0_2 = arith.constant 0 : index
    %4 = memref.load %arg2[%c0_2] : memref<1xf32, #tpu.memory_space<smem>>
    %5 = vector.broadcast %4 : f32 to vector<16x128xf32>
    %6 = arith.addf %3, %5 : vector<16x128xf32>
    %c1 = arith.constant 1 : index
    %7 = memref.load %arg1[%c1] : memref<3xf32, #tpu.memory_space<smem>>
    %c0_3 = arith.constant 0 : index
    %c0_4 = arith.constant 0 : index
    %8 = vector.load %arg4[%c0_3, %c0_4] : memref<16x128xf32, #tpu.memory_space<vmem>>, vector<16x128xf32>
    %9 = vector.broadcast %7 : f32 to vector<16x128xf32>
    %10 = arith.mulf %9, %8 : vector<16x128xf32>
    %11 = arith.addf %6, %10 : vector<16x128xf32>
    %c2 = arith.constant 2 : index
    %12 = memref.load %arg1[%c2] : memref<3xf32, #tpu.memory_space<smem>>
    %c0_5 = arith.constant 0 : index
    %c0_6 = arith.constant 0 : index
    %13 = vector.load %arg5[%c0_5, %c0_6] : memref<16x128xf32, #tpu.memory_space<vmem>>, vector<16x128xf32>
    %14 = vector.broadcast %12 : f32 to vector<16x128xf32>
    %15 = arith.mulf %14, %13 : vector<16x128xf32>
    %16 = arith.addf %11, %15 : vector<16x128xf32>
    %c0_7 = arith.constant 0 : index
    %c0_8 = arith.constant 0 : index
    %17 = vector.load %arg6[%c0_7, %c0_8] : memref<16x128xf32, #tpu.memory_space<vmem>>, vector<16x128xf32>
    tpu.vector_store %arg6[%c0_7, %c0_8], %16 {strides = array<i32>} : memref<16x128xf32, #tpu.memory_space<vmem>>, vector<16x128xf32>,
    return
  }
  func.func @transform_0(%arg0: i32) -> i32 {
    %c0_i32 = arith.constant 0 : i32
    %c0_i32_0 = arith.constant 0 : i32
    return %c0_i32 : i32
  }
  func.func @transform_1(%arg0: i32) -> i32 {
    %c0_i32 = arith.constant 0 : i32
    %c0_i32_0 = arith.constant 0 : i32
    return %c0_i32 : i32
  }
  func.func @transform_2(%arg0: i32) -> (i32, i32) {
    %c0_i32 = arith.constant 0 : i32
    %c0_i32_0 = arith.constant 0 : i32
    return %arg0, %c0_i32 : i32, i32
  }
  func.func @transform_3(%arg0: i32) -> (i32, i32) {
    %c0_i32 = arith.constant 0 : i32
    %c0_i32_0 = arith.constant 0 : i32
    return %arg0, %c0_i32 : i32, i32
  }
  func.func @transform_4(%arg0: i32) -> (i32, i32) {
    %c0_i32 = arith.constant 0 : i32
    %c0_i32_0 = arith.constant 0 : i32
    return %arg0, %c0_i32 : i32, i32
  }
  func.func @transform_5(%arg0: i32) -> (i32, i32) {
    %c0_i32 = arith.constant 0 : i32
    %c0_i32_0 = arith.constant 0 : i32
    return %arg0, %c0_i32 : i32, i32
  }
}

</mosaic_0001>

<llo_original>
// kernel: tpu_custom_call.1
$region0: #{tpu_custom_call.1}
  #allocation0 [shape = 'u32[]', space=smem, size = 0x4, offset = 0x4, fixed_abs, tag = 'smem constant byte address 0x4 - core index']
  #allocation1 [shape = 'u32[144,128]{1,0:T(1,128)}', space=vmem, size = 0x12000, scoped, tag = 'internal scratch']
  #allocation2 [shape = 'f32[1]{0:T(128)S(6)}', space=smem, size = 0x200, scoped, tag = 'scoped memory for tpu_custom_call.1']
  %s0 = inlined_call_operand.vmem [shape: f32[3], index: 0, kind: input, shape index: {}]
  %s1 = inlined_call_operand.<no memory space> [shape: f32[1], index: 1, kind: input, shape index: {}]
  %s2 = inlined_call_operand.hbm [shape: f32[16,128], index: 2, kind: input, shape index: {}]
  %s3 = inlined_call_operand.hbm [shape: f32[16,128], index: 3, kind: input, shape index: {}]
  %s4 = inlined_call_operand.hbm [shape: f32[16,128], index: 4, kind: input, shape index: {}]
  %s5 = inlined_call_operand.hbm [shape: f32[16,128], index: 5, kind: output, shape index: {}]
  %s6 = sld [smem:[#allocation0]]
  $region46: #{tpu_custom_call.1} parent=0
    _
  %s8 = ssub.s32 1, %s6
  %s9 = scalar_select 0, %s8, %s6
  %10 = sst [smem:[#allocation2]] %s1
  $region1: #{tpu_custom_call.1} parent=0
    #allocation3 [shape = 'u8[512]{0}', space=smem, size = 0x200, scoped, tag = 'input window, operand 0, single buffered']
    #allocation4 [shape = 's32[1]{0}', space=sflag, size = 0x4, scoped, tag = 'scoped memory for tpu_custom_call.1']
    #allocation5 [shape = 's32[1]{0}', space=sflag, size = 0x4, scoped, tag = 'scoped memory for tpu_custom_call.1']
    #allocation6 [shape = 's32[1]{0}', space=sflag, size = 0x4, scoped, tag = 'scoped memory for tpu_custom_call.1']
    #allocation7 [shape = 'u8[8192]{0}', space=vmem, size = 0x2000, scoped, tag = 'input window, operand 2, single buffered']
    #allocation8 [shape = 'u8[8192]{0}', space=vmem, size = 0x2000, scoped, tag = 'input window, operand 3, single buffered']
    #allocation9 [shape = 's32[1]{0}', space=sflag, size = 0x4, scoped, tag = 'scoped memory for tpu_custom_call.1']
    #allocation10 [shape = 'u8[8192]{0}', space=vmem, size = 0x2000, scoped, tag = 'input window, operand 4, single buffered']
    #allocation11 [shape = 'u8[8192]{0}', space=vmem, size = 0x2000, scoped, tag = 'output window, operand 0, single buffered']
    %11 = vsyncpa [#allocation6], 0
    %12 = vsyncpa [#allocation4], 0
    %13 = vsyncpa [#allocation9], 0
    %14 = vsyncpa [#allocation5], 0
    // Predicated region
    $region2: #{tpu_custom_call.1} parent=1 // pred_check
      _
    $region3: #{tpu_custom_call.1} parent=1 // pred_check_branch
      %16 = sbr.rel (0) target = $region5
    $region4: #{tpu_custom_call.1} parent=1 // pred_region
      %s18 = ssub.s32 16, 16
      %19 = vsyncadd [#allocation6], %s18
      %s21 = sshll.u32 %s0, 4
      %s22 = int_to_ptr.vmem [resolvable:$true] %s21
      %24 = dma.vmem_to_smem %s22, 16, [#allocation3], [#allocation6]
    $region5: #{tpu_custom_call.1} parent=1 // pred_fallthru
      _
    // Predicated region
    $region6: #{tpu_custom_call.1} parent=1 // pred_check
      _
    $region7: #{tpu_custom_call.1} parent=1 // pred_check_branch
      %26 = sbr.rel (0) target = $region9
    $region8: #{tpu_custom_call.1} parent=1 // pred_region
      _
    $region9: #{tpu_custom_call.1} parent=1 // pred_fallthru
      _
    // Predicated region
    $region10: #{tpu_custom_call.1} parent=1 // pred_check
      _
    $region11: #{tpu_custom_call.1} parent=1 // pred_check_branch
      %28 = sbr.rel (0) target = $region13
    $region12: #{tpu_custom_call.1} parent=1 // pred_region
      %s30 = ssub.s32 256, 256
      %31 = vsyncadd [#allocation4], %s30
      %s32 = sshll.u32 [#allocation7], 4
      %s33 = int_to_ptr.vmem [resolvable:$true] %s32
      %38 = dma.hbm_to_vmem [thread:$0]  %s2, 256, %s33, [#allocation4], 128, 128, 8
    $region13: #{tpu_custom_call.1} parent=1 // pred_fallthru
      _
    // Predicated region
    $region14: #{tpu_custom_call.1} parent=1 // pred_check
      _
    $region15: #{tpu_custom_call.1} parent=1 // pred_check_branch
      %40 = sbr.rel (0) target = $region17
    $region16: #{tpu_custom_call.1} parent=1 // pred_region
      %s42 = ssub.s32 256, 256
      %43 = vsyncadd [#allocation9], %s42
      %s44 = sshll.u32 [#allocation8], 4
      %s45 = int_to_ptr.vmem [resolvable:$true] %s44
      %50 = dma.hbm_to_vmem [thread:$0]  %s3, 256, %s45, [#allocation9], 128, 128, 8
    $region17: #{tpu_custom_call.1} parent=1 // pred_fallthru
      _
    // Predicated region
    $region18: #{tpu_custom_call.1} parent=1 // pred_check
      _
    $region19: #{tpu_custom_call.1} parent=1 // pred_check_branch
      %52 = sbr.rel (0) target = $region21
    $region20: #{tpu_custom_call.1} parent=1 // pred_region
      %s54 = ssub.s32 256, 256
      %55 = vsyncadd [#allocation9], %s54
      %s56 = sshll.u32 [#allocation10], 4
      %s57 = int_to_ptr.vmem [resolvable:$true] %s56
      %62 = dma.hbm_to_vmem [thread:$0]  %s4, 256, %s57, [#allocation9], 128, 128, 8
    $region21: #{tpu_custom_call.1} parent=1 // pred_fallthru
      _
    // Predicated region
    $region22: #{tpu_custom_call.1} parent=1 // pred_check
      _
    $region23: #{tpu_custom_call.1} parent=1 // pred_check_branch
      %64 = sbr.rel (0) target = $region25
    $region24: #{tpu_custom_call.1} parent=1 // pred_region
      %65 = dma.done [#allocation6], 16
    $region25: #{tpu_custom_call.1} parent=1 // pred_fallthru
      _
    // Predicated region
    $region26: #{tpu_custom_call.1} parent=1 // pred_check
      _
    $region27: #{tpu_custom_call.1} parent=1 // pred_check_branch
      %67 = sbr.rel (0) target = $region29
    $region28: #{tpu_custom_call.1} parent=1 // pred_region
      %68 = dma.done [#allocation4], 256
    $region29: #{tpu_custom_call.1} parent=1 // pred_fallthru
      _
    // Predicated region
    $region30: #{tpu_custom_call.1} parent=1 // pred_check
      _
    $region31: #{tpu_custom_call.1} parent=1 // pred_check_branch
      %70 = sbr.rel (0) target = $region33
    $region32: #{tpu_custom_call.1} parent=1 // pred_region
      %71 = dma.done [#allocation9], 256
    $region33: #{tpu_custom_call.1} parent=1 // pred_fallthru
      _
    // Predicated region
    $region34: #{tpu_custom_call.1} parent=1 // pred_check
      _
    $region35: #{tpu_custom_call.1} parent=1 // pred_check_branch
      %73 = sbr.rel (0) target = $region37
    $region36: #{tpu_custom_call.1} parent=1 // pred_region
      %74 = dma.done [#allocation9], 256
    $region37: #{tpu_custom_call.1} parent=1 // pred_fallthru
      _
    %75 = sfence
    %s76 = sld [smem:[#allocation3]]
    %v77 = vld [vmem:[#allocation7] sm:$0xff]
    %v78 = vld [vmem:[#allocation7 + $0x8] sm:$0xff]
    %v79 = vstv %s76
    %v80 = vmul.f32 %v79, %v77
    %v81 = vmul.f32 %v79, %v78
    %s82 = sld [smem:[#allocation2]]
    %v83 = vstv %s82
    %v84 = vadd.f32 %v80, %v83
    %v85 = vadd.f32 %v81, %v83
    %s86 = sld [smem:[#allocation3 + $0x1]]
    %v87 = vld [vmem:[#allocation8] sm:$0xff]
    %v88 = vld [vmem:[#allocation8 + $0x8] sm:$0xff]
    %v89 = vstv %s86
    %v90 = vmul.f32 %v89, %v87
    %v91 = vmul.f32 %v89, %v88
    %v92 = vadd.f32 %v84, %v90
    %v93 = vadd.f32 %v85, %v91
    %s94 = sld [smem:[#allocation3 + $0x2]]
    %v95 = vld [vmem:[#allocation10] sm:$0xff]
    %v96 = vld [vmem:[#allocation10 + $0x8] sm:$0xff]
    %v97 = vstv %s94
    %v98 = vmul.f32 %v97, %v95
    %v99 = vmul.f32 %v97, %v96
    %v100 = vadd.f32 %v92, %v98
    %v101 = vadd.f32 %v93, %v99
    %102 = vst [vmem:[#allocation11] sm:$0xff] %v100
    %103 = vst [vmem:[#allocation11 + $0x8] sm:$0xff] %v101
    // Predicated region
    $region38: #{tpu_custom_call.1} parent=1 // pred_check
      _
    $region39: #{tpu_custom_call.1} parent=1 // pred_check_branch
      %105 = sbr.rel (0) target = $region41
    $region40: #{tpu_custom_call.1} parent=1 // pred_region
      %s107 = ssub.s32 256, 256
      %108 = vsyncadd [#allocation5], %s107
      %s109 = sshll.u32 [#allocation11], 4
      %s110 = int_to_ptr.vmem [resolvable:$true] %s109
      %115 = dma.vmem_to_hbm [thread:$0]  %s110, 256, %s5, [#allocation5], 128, 128, 8
    $region41: #{tpu_custom_call.1} parent=1 // pred_fallthru
      _
    // Predicated region
    $region42: #{tpu_custom_call.1} parent=1 // pred_check
      _
    $region43: #{tpu_custom_call.1} parent=1 // pred_check_branch
      %117 = sbr.rel (0) target = $region45
    $region44: #{tpu_custom_call.1} parent=1 // pred_region
      %118 = dma.done [#allocation5], 256
    $region45: #{tpu_custom_call.1} parent=1 // pred_fallthru
      _
    %119 = vsyncpa [#allocation4], 1
    %120 = vsyncpa [#allocation9], 1
    %121 = vsyncpa [#allocation5], 1
    %122 = vsyncpa [#allocation6], 1

</llo_original>
